<compile_context>
chip_gen: v6e
topology: v6e:2x2x1
jax: 0.10.0
libtpu: 0.0.40
codegen_flags: <defaults>
</compile_context>

<pallas_src>
import functools

import jax
import jax.numpy as jnp
from jax.experimental import pallas as pl
from jax.experimental.pallas import tpu as pltpu


def _cdiv(a, b):
    return -(-a // b)


def _cross_entropy_kernel(pred_ref, tgt_ref, out_ref, acc_ref, *,
                          n_total, tm, tiles_per_par, need_mask):
    p = pl.program_id(0)   # "parallel" axis (sharded across cores on megacore)
    i = pl.program_id(1)   # "arbitrary" reduction axis (sequential per core)

    @pl.when(i == 0)
    def _init():
        acc_ref[...] = jnp.zeros_like(acc_ref)

    logits = pred_ref[...].astype(jnp.float32)               # (tm, C)
    tgt = tgt_ref[...]                                        # (tm, 1) int32

    # Numerically stable log-sum-exp along the class (lane) axis.
    m = jnp.max(logits, axis=-1, keepdims=True)               # (tm, 1)
    lse = jnp.log(jnp.sum(jnp.exp(logits - m), axis=-1, keepdims=True))

    # Select-and-reduce gather of the target logit (no log_probs / one-hot
    # float materialization).  Out-of-range targets are not checked (inputs
    # are trusted, matching typical training-loop usage).
    col = jax.lax.broadcasted_iota(jnp.int32, logits.shape, 1)
    tgt_logit = jnp.sum(jnp.where(col == tgt, logits, 0.0),
                        axis=-1, keepdims=True)                # (tm, 1)
    nll = (m + lse) - tgt_logit                                # (tm, 1)

    # Mask ragged/duplicated rows.  Statically skipped when the grid covers
    # exactly n rows.  (The unclamped global row index is used, so a clamped
    # duplicate tile contributes exactly zero.)
    if need_mask:
        row0 = (p * tiles_per_par + i) * tm
        row = jax.lax.broadcasted_iota(jnp.int32, nll.shape, 0) + row0
        nll = jnp.where(row < n_total, nll, 0.0)

    # Pure-VPU per-step accumulate into VMEM scratch (no SMEM scalar RMW).
    acc_ref[...] += nll

    @pl.when(i == pl.num_programs(1) - 1)
    def _finalize():
        partial = jnp.sum(acc_ref[...])                        # one reduce total
        out_ref[...] = jnp.broadcast_to(partial, out_ref.shape)


def get_loss(pred, target, _=None, *, block_rows=None,
             vmem_budget_bytes=16 * 1024 * 1024):
    """pred: (N, C) float logits (f32/bf16 stream through); target: N int ids."""
    pred = jnp.asarray(pred)
    if pred.dtype not in (jnp.bfloat16, jnp.float32):
        # Rare dtypes are widened outside; bf16/f32 are widened in-kernel so
        # HBM traffic on pred stays at the input width.
        pred = pred.astype(jnp.float32)
    target = jnp.asarray(target).reshape(-1).astype(jnp.int32)   # target.view(-1)

    n, c = pred.shape
    assert target.shape[0] == n

    itemsize = jnp.dtype(pred.dtype).itemsize

    # Row tile from a VMEM byte budget: two double-buffered (tm, C) pred tiles
    # stay under ~16 MiB (fits v5e/v6e and v7x's smaller 64 MiB VMEM).
    rows_cap = max(8, (vmem_budget_bytes // (2 * c * itemsize)) // 8 * 8)
    if block_rows is not None:                      # test / tuning override
        rows_cap = max(8, (block_rows // 8) * 8)
    # If everything fits in one tile, take the full (possibly non-multiple-of-8)
    # height: no ragged rows and the mask is compiled out.
    tm = n if n <= rows_cap else rows_cap

    total_tiles = _cdiv(n, tm)
    # Leading "parallel" axis: 2-way split of the row tiles across TensorCores
    # (a real win on v7x megacore; harmless sequential loop elsewhere).
    n_par = 2 if total_tiles >= 2 else 1
    tiles_per_par = _cdiv(total_tiles, n_par)
    need_mask = (n_par * tiles_per_par * tm != n)

    tgt_2d = target.reshape(n, 1)

    def row_block(pi, ii):
        # Clamp so the last core never issues a DMA past the array; the
        # duplicated tile (odd tile count) is zeroed by the in-kernel mask.
        return jnp.minimum(pi * tiles_per_par + ii, total_tiles - 1)

    kernel = functools.partial(
        _cross_entropy_kernel, n_total=n, tm=tm,
        tiles_per_par=tiles_per_par, need_mask=need_mask)

    cost = pl.CostEstimate(
        flops=8 * n * c,
        transcendentals=n * c + n,
        bytes_accessed=n * c * itemsize + n * 4 + n_par * 8 * 128 * 4,
    )

    partials = pl.pallas_call(
        kernel,
        out_shape=jax.ShapeDtypeStruct((n_par, 8, 128), jnp.float32),
        grid=(n_par, tiles_per_par),
        in_specs=[
            pl.BlockSpec((tm, c), lambda pi, ii: (row_block(pi, ii), 0)),
            pl.BlockSpec((tm, 1), lambda pi, ii: (row_block(pi, ii), 0)),
        ],
        # Each parallel slice owns its own output block -> no cross-core race.
        out_specs=pl.BlockSpec((1, 8, 128), lambda pi, ii: (pi, 0, 0)),
        scratch_shapes=[pltpu.VMEM((tm, 1), jnp.float32)],
        compiler_params=pltpu.CompilerParams(
            dimension_semantics=("parallel", "arbitrary"),
            vmem_limit_bytes=32 * 1024 * 1024,
        ),
        cost_estimate=cost,
    )(pred, tgt_2d)

    # Combine the (<=2) per-slice partial sums and normalize by the true N.
    return jnp.sum(partials[:, 0, 0]) * jnp.float32(1.0 / n)


if __name__ == "__main__":
    key = jax.random.PRNGKey(0)
    k1, k2, k3, k4 = jax.random.split(key, 4)

    # Check 1: single full-height tile (no mask path), f32 logits.
    N, C = 8, 16
    pred = jax.random.normal(k1, (N, C), dtype=jnp.float32)
    target = jax.random.randint(k2, (N,), 0, C, dtype=jnp.int32)
    trans_feat = None  # third arg is ignored by the module

    loss = get_loss(pred, target, trans_feat)
    jax.block_until_ready(loss)

    logp = jax.nn.log_softmax(pred, axis=-1)
    ref = -jnp.mean(logp[jnp.arange(N), target])
    assert jnp.allclose(loss, ref, atol=1e-5, rtol=1e-5), (loss, ref)

    # Check 2: multi-tile path with ragged last tile, 2-way parallel split
    # (grid (2,2) with one clamped+masked duplicate tile), bf16 logits.
    N2, C2 = 20, 16
    pred2 = jax.random.normal(k3, (N2, C2), dtype=jnp.float32).astype(jnp.bfloat16)
    target2 = jax.random.randint(k4, (N2,), 0, C2, dtype=jnp.int32)

    loss2 = get_loss(pred2, target2, None, block_rows=8)
    jax.block_until_ready(loss2)

    logp2 = jax.nn.log_softmax(pred2.astype(jnp.float32), axis=-1)
    ref2 = -jnp.mean(logp2[jnp.arange(N2), target2])
    assert jnp.allclose(loss2, ref2, atol=2e-3, rtol=2e-3), (loss2, ref2)

    print("KERNEL_OK")
</pallas_src>

<mosaic_0001>
module attributes {stable_mosaic.version = 11 : i64} {
  func.func @_cross_entropy_kernel(%arg0: i32, %arg1: i32, %arg2: memref<8x16xf32, #tpu.memory_space<vmem>>, %arg3: memref<8x1xi32, #tpu.memory_space<vmem>>, %arg4: memref<1x8x128xf32, #tpu.memory_space<vmem>>, %arg5: memref<8x1xf32, #tpu.memory_space<vmem>>) attributes {dimension_semantics = [#tpu.dimension_semantics<parallel>, #tpu.dimension_semantics<arbitrary>], iteration_bounds = array<i64: 1, 1>, scalar_prefetch = 0 : i64, scratch_operands = 1 : i64, tpu.core_type = #tpu.core_type<tc>, window_params = [{transform_indices = @transform_0, window_bounds = array<i64: 8, 16>}, {transform_indices = @transform_1, window_bounds = array<i64: 8, 1>}, {transform_indices = @transform_2, window_bounds = array<i64: 1, 8, 128>}]} {
    %c0_i32 = arith.constant 0 : i32
    %0 = arith.cmpi eq, %arg1, %c0_i32 : i32
    %1 = arith.extui %0 : i1 to i32
    %c0_i32_0 = arith.constant 0 : i32
    %2 = arith.cmpi ne, %1, %c0_i32_0 : i32
    scf.if %2 {
      %cst_13 = arith.constant 0.000000e+00 : f32
      %28 = vector.broadcast %cst_13 : f32 to vector<8x1xf32>
      %c0_14 = arith.constant 0 : index
      %c0_15 = arith.constant 0 : index
      %29 = vector.load %arg5[%c0_14, %c0_15] : memref<8x1xf32, #tpu.memory_space<vmem>>, vector<8x1xf32>
      tpu.vector_store %arg5[%c0_14, %c0_15], %28 {strides = array<i32>} : memref<8x1xf32, #tpu.memory_space<vmem>>, vector<8x1xf32>,
    } else {
    }
    %c0 = arith.constant 0 : index
    %c0_1 = arith.constant 0 : index
    %3 = vector.load %arg2[%c0, %c0_1] : memref<8x16xf32, #tpu.memory_space<vmem>>, vector<8x16xf32>
    %c0_2 = arith.constant 0 : index
    %c0_3 = arith.constant 0 : index
    %4 = vector.load %arg3[%c0_2, %c0_3] : memref<8x1xi32, #tpu.memory_space<vmem>>, vector<8x1xi32>
    %cst = arith.constant dense<0xFF800000> : vector<8xf32>
    %5 = vector.multi_reduction <maximumf>, %3, %cst [1] : vector<8x16xf32> to vector<8xf32>
    %6 = vector.shape_cast %5 : vector<8xf32> to vector<8x1xf32>
    %7 = vector.broadcast %6 : vector<8x1xf32> to vector<8x16xf32>
    %8 = arith.subf %3, %7 : vector<8x16xf32>
    %9 = math.exp %8 : vector<8x16xf32>
    %cst_4 = arith.constant dense<0.000000e+00> : vector<8xf32>
    %10 = vector.multi_reduction <add>, %9, %cst_4 [1] : vector<8x16xf32> to vector<8xf32>
    %11 = vector.shape_cast %10 : vector<8xf32> to vector<8x1xf32>
    %12 = math.log %11 : vector<8x1xf32>
    %13 = tpu.iota {dimensions = array<i32: 1>} : vector<8x16xi32>
    %14 = vector.broadcast %4 : vector<8x1xi32> to vector<8x16xi32>
    %15 = arith.cmpi eq, %13, %14 : vector<8x16xi32>
    %cst_5 = arith.constant 0.000000e+00 : f32
    %16 = vector.broadcast %cst_5 : f32 to vector<8x16xf32>
    %17 = arith.select %15, %3, %16 : vector<8x16xi1>, vector<8x16xf32>
    %cst_6 = arith.constant dense<0.000000e+00> : vector<8xf32>
    %18 = vector.multi_reduction <add>, %17, %cst_6 [1] : vector<8x16xf32> to vector<8xf32>
    %19 = vector.shape_cast %18 : vector<8xf32> to vector<8x1xf32>
    %20 = arith.addf %6, %12 : vector<8x1xf32>
    %21 = arith.subf %20, %19 : vector<8x1xf32>
    %c0_7 = arith.constant 0 : index
    %c0_8 = arith.constant 0 : index
    %22 = vector.load %arg5[%c0_7, %c0_8] : memref<8x1xf32, #tpu.memory_space<vmem>>, vector<8x1xf32>
    %23 = arith.addf %22, %21 : vector<8x1xf32>
    %c0_9 = arith.constant 0 : index
    %c0_10 = arith.constant 0 : index
    %24 = vector.load %arg5[%c0_9, %c0_10] : memref<8x1xf32, #tpu.memory_space<vmem>>, vector<8x1xf32>
    tpu.vector_store %arg5[%c0_9, %c0_10], %23 {strides = array<i32>} : memref<8x1xf32, #tpu.memory_space<vmem>>, vector<8x1xf32>,
    %c0_i32_11 = arith.constant 0 : i32
    %25 = arith.cmpi eq, %arg1, %c0_i32_11 : i32
    %26 = arith.extui %25 : i1 to i32
    %c0_i32_12 = arith.constant 0 : i32
    %27 = arith.cmpi ne, %26, %c0_i32_12 : i32
    scf.if %27 {
      %c0_13 = arith.constant 0 : index
      %c0_14 = arith.constant 0 : index
      %28 = vector.load %arg5[%c0_13, %c0_14] : memref<8x1xf32, #tpu.memory_space<vmem>>, vector<8x1xf32>
      %29 = vector.shape_cast %28 : vector<8x1xf32> to vector<1x8x1xf32>
      %cst_15 = arith.constant dense<0.000000e+00> : vector<1xf32>
      %30 = vector.multi_reduction <add>, %29, %cst_15 [1, 2] : vector<1x8x1xf32> to vector<1xf32>
      %31 = vector.shape_cast %30 : vector<1xf32> to vector<1x1x1xf32>
      %32 = vector.extract %31[0, 0, 0] : f32 from vector<1x1x1xf32>
      %33 = vector.broadcast %32 : f32 to vector<1x8x128xf32>
      %c0_16 = arith.constant 0 : index
      %c0_17 = arith.constant 0 : index
      %c0_18 = arith.constant 0 : index
      %34 = vector.load %arg4[%c0_16, %c0_17, %c0_18] : memref<1x8x128xf32, #tpu.memory_space<vmem>>, vector<1x8x128xf32>
      tpu.vector_store %arg4[%c0_16, %c0_17, %c0_18], %33 {strides = array<i32>} : memref<1x8x128xf32, #tpu.memory_space<vmem>>, vector<1x8x128xf32>,
    } else {
    }
    return
  }
  func.func @transform_0(%arg0: i32, %arg1: i32) -> (i32, i32) {
    %c1_i32 = arith.constant 1 : i32
    %0 = arith.muli %arg0, %c1_i32 : i32
    %1 = arith.addi %0, %arg1 : i32
    %c0_i32 = arith.constant 0 : i32
    %2 = arith.minsi %1, %c0_i32 : i32
    %c0_i32_0 = arith.constant 0 : i32
    %c0_i32_1 = arith.constant 0 : i32
    return %2, %c0_i32_0 : i32, i32
  }
  func.func @transform_1(%arg0: i32, %arg1: i32) -> (i32, i32) {
    %c1_i32 = arith.constant 1 : i32
    %0 = arith.muli %arg0, %c1_i32 : i32
    %1 = arith.addi %0, %arg1 : i32
    %c0_i32 = arith.constant 0 : i32
    %2 = arith.minsi %1, %c0_i32 : i32
    %c0_i32_0 = arith.constant 0 : i32
    %c0_i32_1 = arith.constant 0 : i32
    return %2, %c0_i32_0 : i32, i32
  }
  func.func @transform_2(%arg0: i32, %arg1: i32) -> (i32, i32, i32) {
    %c0_i32 = arith.constant 0 : i32
    %c0_i32_0 = arith.constant 0 : i32
    %c0_i32_1 = arith.constant 0 : i32
    return %arg0, %c0_i32, %c0_i32_0 : i32, i32, i32
  }
}

</mosaic_0001>

<llo_original>
// kernel: tpu_custom_call.1
$region0: #{tpu_custom_call.1}
  #allocation0 [shape = 'u32[]', space=smem, size = 0x4, offset = 0x4, fixed_abs, tag = 'smem constant byte address 0x4 - core index']
  #allocation1 [shape = 'u32[144,128]{1,0:T(1,128)}', space=vmem, size = 0x12000, scoped, tag = 'internal scratch']
  #allocation2 [shape = 'f32[8,1]{1,0:T(8,128)}', space=vmem, size = 0x1000, scoped, tag = 'scratch operand']
  %s0 = inlined_call_operand.vmem [shape: f32[8,16], index: 0, kind: input, shape index: {}]
  %s1 = inlined_call_operand.vmem [shape: s32[8,1], index: 1, kind: input, shape index: {}]
  %s2 = inlined_call_operand.hbm [shape: f32[1,8,128], index: 2, kind: output, shape index: {}]
  %s3 = sld [smem:[#allocation0]]
  $region26: #{tpu_custom_call.1} parent=0
    _
  %s5 = ssub.s32 1, %s3
  %s6 = scalar_select 0, %s5, %s3
  $region1: #{tpu_custom_call.1} parent=0
    #allocation3 [shape = 'u8[4096]{0}', space=vmem, size = 0x1000, scoped, tag = 'output window, operand 0, single buffered']
    #allocation4 [shape = 's32[1]{0}', space=sflag, size = 0x4, scoped, tag = 'scoped memory for tpu_custom_call.1']
    %7 = vsyncpa [#allocation4], 0
    // Predicated region
    $region2: #{tpu_custom_call.1} parent=1 // pred_check
      _
    $region3: #{tpu_custom_call.1} parent=1 // pred_check_branch
      %9 = sbr.rel (0) target = $region5
    $region4: #{tpu_custom_call.1} parent=1 // pred_region
      %s10 = sadd.s32 0, 0
      %p11 = scmp.lt.s32.totalorder %s10, 0
      %s12 = scalar_select %p11, %s10, 0
      %p13 = scmp.lt.s32.totalorder %s12, 0
      %s14 = scalar_select %p13, %s12, 0
      %s15 = smul.addr %s14, 8
      %s16 = scalar_lea.vmem %s0, %s15
      %s17 = sadd.s32 0, 0
      %p18 = scmp.lt.s32.totalorder %s17, 0
      %s19 = scalar_select %p18, %s17, 0
    $region5: #{tpu_custom_call.1} parent=1 // pred_fallthru
      _
    // Predicated region
    $region6: #{tpu_custom_call.1} parent=1 // pred_check
      _
    $region7: #{tpu_custom_call.1} parent=1 // pred_check_branch
      %21 = sbr.rel (0) target = $region9
    $region8: #{tpu_custom_call.1} parent=1 // pred_region
      %s22 = sadd.s32 0, 0
      %p23 = scmp.lt.s32.totalorder %s22, 0
      %s24 = scalar_select %p23, %s22, 0
      %p25 = scmp.lt.s32.totalorder %s24, 0
      %s26 = scalar_select %p25, %s24, 0
      %s27 = smul.addr %s26, 8
      %s28 = scalar_lea.vmem %s1, %s27
      %s29 = sadd.s32 0, 0
      %p30 = scmp.lt.s32.totalorder %s29, 0
      %s31 = scalar_select %p30, %s29, 0
    $region9: #{tpu_custom_call.1} parent=1 // pred_fallthru
      _
    %s32 = sadd.s32 0, 0
    %p33 = scmp.lt.s32.totalorder %s32, 0
    %s34 = scalar_select %p33, %s32, 0
    %p35 = scmp.lt.s32.totalorder %s34, 0
    %s36 = scalar_select %p35, %s34, 0
    %s37 = smul.addr %s36, 8
    %s38 = scalar_lea.vmem %s0, %s37
    %s39 = sadd.s32 0, 0
    %p40 = scmp.lt.s32.totalorder %s39, 0
    %s41 = scalar_select %p40, %s39, 0
    %p42 = scmp.lt.s32.totalorder %s41, 0
    %s43 = scalar_select %p42, %s41, 0
    %s44 = smul.addr %s43, 8
    %s45 = scalar_lea.vmem %s1, %s44
    %s46 = sadd.s32 0, 0
    %p47 = scmp.lt.s32.totalorder %s46, 0
    %s48 = scalar_select %p47, %s46, 0
    %p49 = scmp.lt.s32.totalorder %s48, 0
    %s50 = scalar_select %p49, %s48, 0
    %s51 = smul.addr %s50, 8
    %s52 = scalar_lea.vmem %s0, %s51
    %s53 = sadd.s32 0, 0
    %p54 = scmp.lt.s32.totalorder %s53, 0
    %s55 = scalar_select %p54, %s53, 0
    %s56 = sadd.s32 0, 0
    %p57 = scmp.lt.s32.totalorder %s56, 0
    %s58 = scalar_select %p57, %s56, 0
    %p59 = scmp.lt.s32.totalorder %s58, 0
    %s60 = scalar_select %p59, %s58, 0
    %s61 = smul.addr %s60, 8
    %s62 = scalar_lea.vmem %s1, %s61
    %s63 = sadd.s32 0, 0
    %p64 = scmp.lt.s32.totalorder %s63, 0
    %s65 = scalar_select %p64, %s63, 0
    %p66 = scmp.eq.s32.totalorder 0, 0
    // Predicated region
    $region10: #{tpu_custom_call.1} parent=1 // pred_check
      %p67 = pneg %p66
    $region11: #{tpu_custom_call.1} parent=1 // pred_check_branch
      %69 = sbr.rel (%p67) target = $region13
    $region12: #{tpu_custom_call.1} parent=1 // pred_region
      %vm70 = vcmask 7168
      %71 = vst.msk [vmem:[#allocation2] sm:$0xff] %vm70, 0.0
    $region13: #{tpu_custom_call.1} parent=1 // pred_fallthru
      _
    %v72 = vld [vmem:[%s52] sm:$0xff]
    %v73 = vld [vmem:[%s62] sm:$0xff]
    %vm74 = vcmask 130048
    %v75 = vsel %vm74, %v72, -inf
    %76 = vmax.xlane.f32.xlu0 %v75
    %v77 = vpop.xlane.xlu0 %76
    %v78 = vsub.f32 %v72, %v77
    %v79 = vmul.f32 %v78, 1.442695
    %v80 = vpow.pop %v79
    %v81 = vsel %vm74, %v80, 0.0
    %82 = vadd.xlane.f32.xlu0 %v81
    %v83 = vpop.xlane.xlu0 %82
    %v84 = vlog2.pop %v83
    %v85 = vmul.f32 %v84, 0.6931472
    %v86 = vlaneseq
    %v87 = vand.u32 %v86, 127
    %88 = vset.pattern.permute.xlu0 0
    %89 = vperm.xlu0 %88, %v73
    %v90 = vpop.permute.xlu0 %89
    %vm91 = vcmp.eq.s32.totalorder %v87, %v90
    %v92 = vsel %vm91, %v72, 0.0
    %v93 = vsel %vm74, %v92, 0.0
    %94 = vadd.xlane.f32.xlu0 %v93
    %v95 = vpop.xlane.xlu0 %94
    %v96 = vadd.f32 %v77, %v85
    %v97 = vsub.f32 %v96, %v95
    %v98 = vld [vmem:[#allocation2] sm:$0xff]
    %v99 = vadd.f32 %v98, %v97
    %vm100 = vcmask 7168
    %101 = vst.msk [vmem:[#allocation2] sm:$0xff] %vm100, %v99
    // Predicated region
    $region14: #{tpu_custom_call.1} parent=1 // pred_check
      %p102 = pneg %p66
    $region15: #{tpu_custom_call.1} parent=1 // pred_check_branch
      %104 = sbr.rel (%p102) target = $region17
    $region16: #{tpu_custom_call.1} parent=1 // pred_region
      %v105 = vld [vmem:[#allocation2] sm:$0xff]
      %v106 = vsel %vm100, %v105, 0.0
      %107 = vadd.xlane.f32.xlu0 %v106
      %v108 = vpop.xlane.xlu0 %107
      %v109 = vrot.slane %v108, 4
      %v110 = vadd.f32 %v108, %v109
      %v111 = vrot.slane %v110, 2
      %v112 = vadd.f32 %v110, %v111
      %v113 = vrot.slane %v112, 1
      %v114 = vadd.f32 %v112, %v113
      %s115 = vtos %v114
      %v116 = vstv %s115
      %117 = vst [vmem:[#allocation3] sm:$0xff] %v116
    $region17: #{tpu_custom_call.1} parent=1 // pred_fallthru
      _
    // Predicated region
    $region18: #{tpu_custom_call.1} parent=1 // pred_check
      _
    $region19: #{tpu_custom_call.1} parent=1 // pred_check_branch
      %119 = sbr.rel (0) target = $region21
    $region20: #{tpu_custom_call.1} parent=1 // pred_region
      %s121 = ssub.s32 128, 128
      %122 = vsyncadd [#allocation4], %s121
      %s124 = sshll.u32 [#allocation3], 4
      %s125 = int_to_ptr.vmem [resolvable:$true] %s124
      %127 = dma.vmem_to_hbm [thread:$0]  %s125, 128, %s2, [#allocation4]
    $region21: #{tpu_custom_call.1} parent=1 // pred_fallthru
      _
    // Predicated region
    $region22: #{tpu_custom_call.1} parent=1 // pred_check
      _
    $region23: #{tpu_custom_call.1} parent=1 // pred_check_branch
      %129 = sbr.rel (0) target = $region25
    $region24: #{tpu_custom_call.1} parent=1 // pred_region
      %130 = dma.done [#allocation4], 128
    $region25: #{tpu_custom_call.1} parent=1 // pred_fallthru
      _
    %131 = vsyncpa [#allocation4], 1

</llo_original>
